<compile_context>
chip_gen: v7x
topology: tpu7x:2x2x1
jax: 0.10.0
libtpu: 0.0.40
codegen_flags: <defaults>
</compile_context>

<pallas_src>
import functools
import math

import numpy as np

import jax
import jax.numpy as jnp
from jax.experimental import pallas as pl
from jax.experimental.pallas import tpu as pltpu


_VMEM_LIMIT = 32 * 1024 * 1024   # explicit; safe on v5e/v6e/v7x (v7x physical VMEM = 64 MiB)


def _row_tile(n, target=256):
    """Row-tile size: tile large row counts at `target`, fall back to full N otherwise."""
    return target if (n > target and n % target == 0) else n


# --------------------------------------------------------------------------------------
# Pallas kernels
# --------------------------------------------------------------------------------------

def _linear_kernel(x_ref, w_ref, b_ref, o_ref):
    # y = x @ w + b  (one row tile per grid step, output lane-dense over cout)
    o_ref[...] = jnp.dot(x_ref[...], w_ref[...],
                         preferred_element_type=jnp.float32) + b_ref[...]


def pallas_linear(x, w, b):
    n, cin = x.shape
    cout = w.shape[1]
    tn = _row_tile(n)
    return pl.pallas_call(
        _linear_kernel,
        out_shape=jax.ShapeDtypeStruct((n, cout), jnp.float32),
        grid=(n // tn,),
        in_specs=[pl.BlockSpec((tn, cin), lambda i: (i, 0)),
                  pl.BlockSpec((cin, cout), lambda i: (0, 0)),
                  pl.BlockSpec((1, cout), lambda i: (0, 0))],
        out_specs=pl.BlockSpec((tn, cout), lambda i: (i, 0)),
        compiler_params=pltpu.CompilerParams(
            dimension_semantics=("parallel",),
            vmem_limit_bytes=_VMEM_LIMIT),
    )(x, w, b.reshape(1, cout))


def _gelu_tanh(x):
    # tanh-form GELU: transcendental runs on the EUP slot (vs. a long VALU erf polynomial).
    c = math.sqrt(2.0 / math.pi)
    return 0.5 * x * (1.0 + jnp.tanh(c * (x + 0.044715 * x * x * x)))


def _hgt_dst_kernel(q_ref, k_ref, v_ref, wk_ref, wv_ref, mask_ref,
                    wout_ref, bout_ref, xdst_ref, gate_ref, o_ref,
                    *, heads, head_dim, rel_slices):
    """Fused per-destination-type HGT conv: rel transforms + masked softmax attention +
    GELU + out projection + gated skip, for one tile of destination rows."""

    # ---- relation-specific K/V transforms (block-diagonal over heads), kept in VMEM ----
    # Recomputed per row tile: O(S*HD^2) is small next to the O(Ntile*S*HD) attention and
    # avoids cross-grid-step scratch, keeping the row axis safely "parallel".
    kt_parts, vt_parts = [], []
    for r, (off, ns) in enumerate(rel_slices):          # static python loop (R small)
        k_r = k_ref[off:off + ns, :]
        v_r = v_ref[off:off + ns, :]
        kt_parts.append(jnp.dot(k_r, wk_ref[r], preferred_element_type=jnp.float32))
        vt_parts.append(jnp.dot(v_r, wv_ref[r], preferred_element_type=jnp.float32))
    kt = kt_parts[0] if len(kt_parts) == 1 else jnp.concatenate(kt_parts, axis=0)
    vt = vt_parts[0] if len(vt_parts) == 1 else jnp.concatenate(vt_parts, axis=0)

    q = q_ref[...]                       # [Ntile, H*D]
    valid = mask_ref[...] > 0            # int8 -> bool, [Ntile, S]
    neg = jnp.float32(-1e30)

    # ---- per-head masked softmax attention (p_rel/sqrt(D) already folded into wk) ----
    # TODO(synk): for large graphs add an S grid axis with a flash-style online softmax
    # (running m/l/acc scratch, S axis last + "arbitrary") so the [Ntile, S] score tile
    # stays bounded in VMEM instead of holding the full source axis densely.
    head_outs = []
    for h in range(heads):               # static unrolled loop, H small
        sl = slice(h * head_dim, (h + 1) * head_dim)
        q_h, kt_h, vt_h = q[:, sl], kt[:, sl], vt[:, sl]
        s_h = jax.lax.dot_general(q_h, kt_h, (((1,), (1,)), ((), ())),
                                  preferred_element_type=jnp.float32)      # [Ntile, S]
        s_h = jnp.where(valid, s_h, neg)
        m_h = jnp.max(s_h, axis=-1, keepdims=True)
        e_h = jnp.where(valid, jnp.exp(s_h - m_h), 0.0)
        l_h = jnp.sum(e_h, axis=-1, keepdims=True)
        inv_l = pl.reciprocal(jnp.where(l_h > 0, l_h, 1.0), approx=True)   # EUP, ~free
        alpha_h = e_h * inv_l            # rows with no incoming edges -> all-zero alpha
        head_outs.append(jnp.dot(alpha_h, vt_h, preferred_element_type=jnp.float32))
    agg = head_outs[0] if heads == 1 else jnp.concatenate(head_outs, axis=-1)  # [Ntile, H*D]

    # ---- fused GELU + output projection + gated skip (single lane-dense store) ----
    g = _gelu_tanh(agg)
    a = jnp.dot(g, wout_ref[...], preferred_element_type=jnp.float32) + bout_ref[...]
    gate = gate_ref[0, 0]                # sigmoid(skip), scalar in SMEM
    o_ref[...] = gate * a + (1.0 - gate) * xdst_ref[...]


def pallas_hgt_dst(q, k_cat, v_cat, wk, wv, mask, w_out, b_out, x_dst, gate,
                   *, heads, head_dim, rel_slices):
    n_dst, hd = q.shape
    s = k_cat.shape[0]
    r = wk.shape[0]
    tn = _row_tile(n_dst)
    kern = functools.partial(_hgt_dst_kernel, heads=heads, head_dim=head_dim,
                             rel_slices=rel_slices)
    return pl.pallas_call(
        kern,
        out_shape=jax.ShapeDtypeStruct((n_dst, hd), jnp.float32),
        grid=(n_dst // tn,),
        in_specs=[
            pl.BlockSpec((tn, hd), lambda i: (i, 0)),            # q (dst rows)
            pl.BlockSpec((s, hd), lambda i: (0, 0)),             # K sources (concatenated)
            pl.BlockSpec((s, hd), lambda i: (0, 0)),             # V sources
            pl.BlockSpec((r, hd, hd), lambda i: (0, 0, 0)),      # block-diag k_rel (scaled)
            pl.BlockSpec((r, hd, hd), lambda i: (0, 0, 0)),      # block-diag v_rel
            pl.BlockSpec((tn, s), lambda i: (i, 0)),             # edge mask (int8)
            pl.BlockSpec((hd, hd), lambda i: (0, 0)),            # out projection W
            pl.BlockSpec((1, hd), lambda i: (0, 0)),             # out projection b
            pl.BlockSpec((tn, hd), lambda i: (i, 0)),            # skip input x_dst
            pl.BlockSpec(memory_space=pltpu.MemorySpace.SMEM),   # sigmoid(skip) scalar
        ],
        out_specs=pl.BlockSpec((tn, hd), lambda i: (i, 0)),
        compiler_params=pltpu.CompilerParams(
            dimension_semantics=("parallel",),
            vmem_limit_bytes=_VMEM_LIMIT),
    )(q, k_cat, v_cat, wk, wv, mask, w_out, b_out.reshape(1, hd), x_dst, gate)


# --------------------------------------------------------------------------------------
# Graph plan (built once, shared by both conv layers) and wrapper glue
# --------------------------------------------------------------------------------------

def build_graph_plan(edge_index_dict, num_nodes):
    """Per dst node type: relation order, static source-slot offsets, and an int8 mask."""
    dst_types = sorted({et[2] for et in edge_index_dict})
    plan = {}
    for dst in dst_types:
        rels = [et for et in edge_index_dict if et[2] == dst]
        offsets, sizes, off = [], [], 0
        for et in rels:
            n_src = num_nodes[et[0]]
            offsets.append(off); sizes.append(n_src); off += n_src
        s_total = off
        n_dst = num_nodes[dst]
        mask = jnp.zeros((n_dst, s_total), jnp.int8)
        for et, o in zip(rels, offsets):
            ei = np.asarray(edge_index_dict[et])
            flat = ei[1].astype(np.int64) * s_total + (o + ei[0].astype(np.int64))
            # Dense masked softmax assumes a duplicate-free edge list (PyG's segment
            # softmax would count parallel edges separately) -- assert it here.
            assert np.unique(flat).shape[0] == flat.shape[0], \
                f"duplicate edges in {et}: dense mask softmax requires duplicate-free edges"
            mask = mask.at[edge_index_dict[et][1], o + edge_index_dict[et][0]].set(1)
        plan[dst] = dict(rels=rels, slices=tuple(zip(offsets, sizes)), mask=mask)
    return plan


def _head_block_diag(w_hdd, scale_h=None):
    """[H, D, D] per-head weights -> [H*D, H*D] block-diagonal (optionally scaled/head)."""
    h, dd, _ = w_hdd.shape
    if scale_h is not None:
        w_hdd = w_hdd * scale_h[:, None, None]
    eye = jnp.eye(h, dtype=w_hdd.dtype)
    bd = jnp.einsum('hde,hg->hdge', w_hdd, eye)        # [H, D, H, D], zero off-diagonal
    return bd.reshape(h * dd, h * dd)


def hgt_conv_pallas(x_dict, plan, p, heads):
    f_out = p['out_channels']
    d = f_out // heads
    inv_sqrt_d = 1.0 / math.sqrt(d)

    # kqv_lin per node type (row-tiled, lane-dense [N, 3*f_out] output), then split cols.
    kqv = {nt: pallas_linear(x, p['kqv_w'][nt], p['kqv_b'][nt]) for nt, x in x_dict.items()}
    k_dict = {nt: kv[:, :f_out] for nt, kv in kqv.items()}          # heads folded: [N, H*D]
    q_dict = {nt: kv[:, f_out:2 * f_out] for nt, kv in kqv.items()}
    v_dict = {nt: kv[:, 2 * f_out:] for nt, kv in kqv.items()}

    out_dict = {}
    for dst, info in plan.items():
        rels = info['rels']
        k_cat = jnp.concatenate([k_dict[et[0]] for et in rels], axis=0)   # [S, H*D]
        v_cat = jnp.concatenate([v_dict[et[0]] for et in rels], axis=0)
        # p_rel[h] / sqrt(D) folded into the K relation blocks (no [N,S] scaling in-kernel)
        wk = jnp.stack([_head_block_diag(p['k_rel'][et], p['p_rel'][et] * inv_sqrt_d)
                        for et in rels])                                   # [R, H*D, H*D]
        wv = jnp.stack([_head_block_diag(p['v_rel'][et]) for et in rels])
        gate = jax.nn.sigmoid(p['skip'][dst]).reshape(1, 1).astype(jnp.float32)

        # HGTConv applies the skip connection only when dims match (true for our config).
        assert f_out == x_dict[dst].shape[-1]
        out_dict[dst] = pallas_hgt_dst(
            q_dict[dst], k_cat, v_cat, wk, wv, info['mask'],
            p['out_w'][dst], p['out_b'][dst], x_dict[dst], gate,
            heads=heads, head_dim=d, rel_slices=info['slices'])
    return out_dict


def hgt_forward_pallas(x_dict, edge_index_dict, params, heads):
    plan = build_graph_plan(edge_index_dict, {nt: x.shape[0] for nt, x in x_dict.items()})
    x_dict = {nt: pallas_linear(x, params['lin_w'][nt], params['lin_b'][nt])
              for nt, x in x_dict.items()}
    x_dict = hgt_conv_pallas(x_dict, plan, params['conv1'], heads)
    x_dict = hgt_conv_pallas(x_dict, plan, params['conv2'], heads)
    return x_dict


# --------------------------------------------------------------------------------------
# Pure-JAX reference (exact-erf GELU, explicit heads) used only for validation
# --------------------------------------------------------------------------------------

def ref_hgt_conv(x_dict, edge_index_dict, p, heads):
    f_out = p['out_channels']
    d = f_out // heads
    kqv = {nt: x @ p['kqv_w'][nt] + p['kqv_b'][nt][None, :] for nt, x in x_dict.items()}
    k_dict = {nt: v[:, :f_out].reshape(-1, heads, d) for nt, v in kqv.items()}
    q_dict = {nt: v[:, f_out:2 * f_out].reshape(-1, heads, d) for nt, v in kqv.items()}
    v_dict = {nt: v[:, 2 * f_out:].reshape(-1, heads, d) for nt, v in kqv.items()}

    dst_types = sorted({et[2] for et in edge_index_dict})
    out_dict = {}
    for dst_nt in dst_types:
        n_dst = q_dict[dst_nt].shape[0]
        ks, vs, prs, ms = [], [], [], []
        for et, ei in edge_index_dict.items():
            src_nt, _, d_nt = et
            if d_nt != dst_nt:
                continue
            k_src = jnp.transpose(k_dict[src_nt], (1, 0, 2))
            v_src = jnp.transpose(v_dict[src_nt], (1, 0, 2))
            kt = jnp.einsum('hsd,hde->hse', k_src, p['k_rel'][et])
            vt = jnp.einsum('hsd,hde->hse', v_src, p['v_rel'][et])
            n_src = k_src.shape[1]
            m = jnp.zeros((n_dst, n_src), jnp.float32).at[ei[1], ei[0]].set(1.0)
            pr = jnp.broadcast_to(p['p_rel'][et][:, None, None], (heads, 1, n_src))
            ks.append(kt); vs.append(vt); prs.append(pr); ms.append(m)
        K = jnp.concatenate(ks, axis=1); V = jnp.concatenate(vs, axis=1)
        prel = jnp.concatenate(prs, axis=2); mask = jnp.concatenate(ms, axis=1)
        Q = jnp.transpose(q_dict[dst_nt], (1, 0, 2))

        scores = jnp.einsum('hnd,hsd->hns', Q, K) * prel * (1.0 / math.sqrt(d))
        scores = jnp.where(mask[None] > 0, scores, -1e30)
        mmax = jnp.max(scores, axis=-1, keepdims=True)
        e = jnp.where(mask[None] > 0, jnp.exp(scores - mmax), 0.0)
        den = jnp.sum(e, axis=-1, keepdims=True)
        alpha = e / jnp.where(den > 0, den, 1.0)
        agg = jnp.einsum('hns,hsd->hnd', alpha, V)
        agg = jnp.transpose(agg, (1, 0, 2)).reshape(n_dst, f_out)

        a = jax.nn.gelu(agg, approximate=False) @ p['out_w'][dst_nt] + p['out_b'][dst_nt][None, :]
        al = jax.nn.sigmoid(p['skip'][dst_nt])
        out_dict[dst_nt] = al * a + (1.0 - al) * x_dict[dst_nt]
    return out_dict


def ref_forward(x_dict, edge_index_dict, params, heads):
    x_dict = {nt: x @ params['lin_w'][nt] + params['lin_b'][nt][None, :]
              for nt, x in x_dict.items()}
    x_dict = ref_hgt_conv(x_dict, edge_index_dict, params['conv1'], heads)
    x_dict = ref_hgt_conv(x_dict, edge_index_dict, params['conv2'], heads)
    return x_dict


# --------------------------------------------------------------------------------------
# Deterministic synthetic parameter init
# --------------------------------------------------------------------------------------

def init_params(key, node_types, edge_types, in_ch, hid, out_ch, heads):
    key_box = [key]

    def w(shape, scale=0.1):
        key_box[0], sub = jax.random.split(key_box[0])
        return (scale * jax.random.normal(sub, shape)).astype(jnp.float32)

    params = {'lin_w': {}, 'lin_b': {}}
    for nt in node_types:
        params['lin_w'][nt] = w((in_ch, hid))
        params['lin_b'][nt] = w((hid,))

    def conv_params(cin, cout):
        d = cout // heads
        p = {'out_channels': cout, 'kqv_w': {}, 'kqv_b': {}, 'out_w': {}, 'out_b': {},
             'skip': {}, 'k_rel': {}, 'v_rel': {}, 'p_rel': {}}
        for nt in node_types:
            p['kqv_w'][nt] = w((cin, 3 * cout))
            p['kqv_b'][nt] = w((3 * cout,))
            p['out_w'][nt] = w((cout, cout))
            p['out_b'][nt] = w((cout,))
            p['skip'][nt] = jnp.ones((), jnp.float32)            # PyG inits skip to 1
        for et in edge_types:
            p['k_rel'][et] = w((heads, d, d))
            p['v_rel'][et] = w((heads, d, d))
            p['p_rel'][et] = 1.0 + w((heads,))                    # relation prior
        return p

    params['conv1'] = conv_params(hid, hid)
    params['conv2'] = conv_params(hid, out_ch)
    return params


# --------------------------------------------------------------------------------------

if __name__ == "__main__":
    node_types = ['author', 'paper']
    edge_types = [('author', 'writes', 'paper'), ('paper', 'rev_writes', 'author')]

    in_ch, hid, out_ch, heads = 8, 32, 32, 4
    n_author, n_paper = 6, 10

    key = jax.random.PRNGKey(0)
    key, k1, k2, kp = jax.random.split(key, 4)
    x_dict = {'author': jax.random.normal(k1, (n_author, in_ch), jnp.float32),
              'paper': jax.random.normal(k2, (n_paper, in_ch), jnp.float32)}

    writes_src = jnp.array([0, 0, 1, 1, 2, 2, 3, 3, 4, 4, 5, 5], jnp.int32)
    writes_dst = jnp.array([0, 1, 2, 3, 4, 5, 6, 7, 8, 9, 0, 2], jnp.int32)
    edge_index_dict = {
        ('author', 'writes', 'paper'): jnp.stack([writes_src, writes_dst]),
        ('paper', 'rev_writes', 'author'): jnp.stack([writes_dst, writes_src]),
    }

    params = init_params(kp, node_types, edge_types, in_ch, hid, out_ch, heads)

    out = hgt_forward_pallas(x_dict, edge_index_dict, params, heads)
    out = jax.block_until_ready(out)

    ref = ref_forward(x_dict, edge_index_dict, params, heads)
    # 2e-3 tolerance: kernel uses tanh-GELU (<4e-4 vs exact erf) + approx EUP reciprocal.
    for nt in out:
        if not jnp.allclose(out[nt], ref[nt], atol=2e-3, rtol=2e-3):
            raise AssertionError(f"Pallas/JAX mismatch for node type {nt}")

    print("KERNEL_OK")
</pallas_src>

<mosaic_0001>
module attributes {stable_mosaic.version = 11 : i64} {
  func.func @_linear_kernel(%arg0: i32, %arg1: memref<6x8xf32, #tpu.memory_space<vmem>>, %arg2: memref<8x32xf32, #tpu.memory_space<vmem>>, %arg3: memref<1x32xf32, #tpu.memory_space<vmem>>, %arg4: memref<6x32xf32, #tpu.memory_space<vmem>>) attributes {dimension_semantics = [#tpu.dimension_semantics<parallel>], iteration_bounds = array<i64: 1>, scalar_prefetch = 0 : i64, scratch_operands = 0 : i64, tpu.core_type = #tpu.core_type<tc>, window_params = [{transform_indices = @transform_0, window_bounds = array<i64: 6, 8>}, {pipeline_mode = #tpu.pipeline_mode<synchronous>, transform_indices = @transform_1, window_bounds = array<i64: 8, 32>}, {pipeline_mode = #tpu.pipeline_mode<synchronous>, transform_indices = @transform_2, window_bounds = array<i64: 1, 32>}, {transform_indices = @transform_3, window_bounds = array<i64: 6, 32>}]} {
    %c0 = arith.constant 0 : index
    %c0_0 = arith.constant 0 : index
    %0 = vector.load %arg1[%c0, %c0_0] : memref<6x8xf32, #tpu.memory_space<vmem>>, vector<6x8xf32>
    %c0_1 = arith.constant 0 : index
    %c0_2 = arith.constant 0 : index
    %1 = vector.load %arg2[%c0_1, %c0_2] : memref<8x32xf32, #tpu.memory_space<vmem>>, vector<8x32xf32>
    %cst = arith.constant dense<0.000000e+00> : vector<6x32xf32>
    %2 = tpu.matmul %0, %1, %cst {dimension_numbers = #tpu.dot_dimension_numbers<[1], [0], [0], [1], [0, 0, 1, 1], [], []>} : vector<6x8xf32>, vector<8x32xf32>, vector<6x32xf32> -> vector<6x32xf32>
    %c0_3 = arith.constant 0 : index
    %c0_4 = arith.constant 0 : index
    %3 = vector.load %arg3[%c0_3, %c0_4] : memref<1x32xf32, #tpu.memory_space<vmem>>, vector<1x32xf32>
    %4 = vector.broadcast %3 : vector<1x32xf32> to vector<6x32xf32>
    %5 = arith.addf %2, %4 : vector<6x32xf32>
    %c0_5 = arith.constant 0 : index
    %c0_6 = arith.constant 0 : index
    %6 = vector.load %arg4[%c0_5, %c0_6] : memref<6x32xf32, #tpu.memory_space<vmem>>, vector<6x32xf32>
    tpu.vector_store %arg4[%c0_5, %c0_6], %5 {strides = array<i32>} : memref<6x32xf32, #tpu.memory_space<vmem>>, vector<6x32xf32>,
    return
  }
  func.func @transform_0(%arg0: i32) -> (i32, i32) {
    %c0_i32 = arith.constant 0 : i32
    %c0_i32_0 = arith.constant 0 : i32
    return %arg0, %c0_i32 : i32, i32
  }
  func.func @transform_1(%arg0: i32) -> (i32, i32) {
    %c0_i32 = arith.constant 0 : i32
    %c0_i32_0 = arith.constant 0 : i32
    %c0_i32_1 = arith.constant 0 : i32
    return %c0_i32, %c0_i32_0 : i32, i32
  }
  func.func @transform_2(%arg0: i32) -> (i32, i32) {
    %c0_i32 = arith.constant 0 : i32
    %c0_i32_0 = arith.constant 0 : i32
    %c0_i32_1 = arith.constant 0 : i32
    return %c0_i32, %c0_i32_0 : i32, i32
  }
  func.func @transform_3(%arg0: i32) -> (i32, i32) {
    %c0_i32 = arith.constant 0 : i32
    %c0_i32_0 = arith.constant 0 : i32
    return %arg0, %c0_i32 : i32, i32
  }
}

</mosaic_0001>

<llo_original>
// kernel: tpu_custom_call.1
$region0: #{tpu_custom_call.1}
  #allocation0 [shape = 'u32[]', space=smem, size = 0x4, offset = 0x4, fixed_abs, tag = 'smem constant byte address 0x4 - core index']
  #allocation1 [shape = 'u32[144,128]{1,0:T(1,128)}', space=vmem, size = 0x12000, scoped, tag = 'internal scratch']
  %s0 = inlined_call_operand.hbm [shape: f32[6,8], index: 0, kind: input, shape index: {}]
  %s1 = inlined_call_operand.hbm [shape: f32[8,32], index: 1, kind: input, shape index: {}]
  %s2 = inlined_call_operand.vmem [shape: f32[1,32], index: 2, kind: input, shape index: {}]
  %s3 = inlined_call_operand.hbm [shape: f32[6,32], index: 3, kind: output, shape index: {}]
  %s4 = sld [smem:[#allocation0]]
  $region30: #{tpu_custom_call.1} parent=0
    _
  %s6 = ssub.s32 1, %s4
  %s7 = scalar_select 0, %s6, %s4
  $region1: #{tpu_custom_call.1} parent=0
    #allocation2 [shape = 'u8[4096]{0}', space=vmem, size = 0x1000, scoped, tag = 'input window, operand 0, single buffered']
    #allocation3 [shape = 's32[1]{0}', space=sflag, size = 0x4, scoped, tag = 'scoped memory for tpu_custom_call.1']
    #allocation4 [shape = 's32[1]{0}', space=sflag, size = 0x4, scoped, tag = 'scoped memory for tpu_custom_call.1']
    #allocation5 [shape = 'u8[4096]{0}', space=vmem, size = 0x1000, scoped, tag = 'input window, operand 1, single buffered']
    #allocation6 [shape = 's32[1]{0}', space=sflag, size = 0x4, scoped, tag = 'scoped memory for tpu_custom_call.1']
    #allocation7 [shape = 'u8[4096]{0}', space=vmem, size = 0x1000, scoped, tag = 'output window, operand 0, single buffered']
    %8 = vsyncpa [#allocation3], 0
    %9 = vsyncpa [#allocation6], 0
    %10 = vsyncpa [#allocation4], 0
    // Predicated region
    $region2: #{tpu_custom_call.1} parent=1 // pred_check
      _
    $region3: #{tpu_custom_call.1} parent=1 // pred_check_branch
      %12 = sbr.rel (0) target = $region5
    $region4: #{tpu_custom_call.1} parent=1 // pred_region
      %s14 = ssub.s32 128, 128
      %15 = vsyncadd [#allocation3], %s14
      %s17 = sshll.u32 [#allocation2], 4
      %s18 = int_to_ptr.vmem [resolvable:$true] %s17
      %20 = dma.hbm_to_vmem [thread:$0]  %s0, 128, %s18, [#allocation3]
    $region5: #{tpu_custom_call.1} parent=1 // pred_fallthru
      _
    // Predicated region
    $region6: #{tpu_custom_call.1} parent=1 // pred_check
      _
    $region7: #{tpu_custom_call.1} parent=1 // pred_check_branch
      %22 = sbr.rel (0) target = $region9
    $region8: #{tpu_custom_call.1} parent=1 // pred_region
      %s24 = ssub.s32 128, 128
      %25 = vsyncadd [#allocation6], %s24
      %s27 = sshll.u32 [#allocation5], 4
      %s28 = int_to_ptr.vmem [resolvable:$true] %s27
      %30 = dma.hbm_to_vmem [thread:$0]  %s1, 128, %s28, [#allocation6]
    $region9: #{tpu_custom_call.1} parent=1 // pred_fallthru
      _
    // Predicated region
    $region10: #{tpu_custom_call.1} parent=1 // pred_check
      _
    $region11: #{tpu_custom_call.1} parent=1 // pred_check_branch
      %32 = sbr.rel (0) target = $region13
    $region12: #{tpu_custom_call.1} parent=1 // pred_region
      _
    $region13: #{tpu_custom_call.1} parent=1 // pred_fallthru
      _
    // Predicated region
    $region14: #{tpu_custom_call.1} parent=1 // pred_check
      _
    $region15: #{tpu_custom_call.1} parent=1 // pred_check_branch
      %34 = sbr.rel (0) target = $region17
    $region16: #{tpu_custom_call.1} parent=1 // pred_region
      %35 = dma.done [#allocation3], 128
    $region17: #{tpu_custom_call.1} parent=1 // pred_fallthru
      _
    // Predicated region
    $region18: #{tpu_custom_call.1} parent=1 // pred_check
      _
    $region19: #{tpu_custom_call.1} parent=1 // pred_check_branch
      %37 = sbr.rel (0) target = $region21
    $region20: #{tpu_custom_call.1} parent=1 // pred_region
      %38 = dma.done [#allocation6], 128
    $region21: #{tpu_custom_call.1} parent=1 // pred_fallthru
      _
    %v39 = vld [vmem:[#allocation2] sm:$0x3f]
    %v40 = vld [vmem:[#allocation5] sm:$0xff]
    %v41 = vld [vmem:[%s2] sm:$0x1]
    %v43 = vlaneseq
    %v44 = vshrl.u32 %v43, 7
    %v45 = vsub.s32 0, %v44
    %v46 = vrot.slane %v41, %v45
    %vm48 = vcmask 64512
    %v50 = vsel %vm48, %v39, 0
    %52 = vmatprep.subr.mxu0 0.0
    %53 = vmatpush1.msra.mxu0 %v40
    %54 = vmatprep.subr.mxu0 0.0
    %55 = vmatpush1.msra.mxu0 0.0
    %56 = vmatprep.subr.mxu0 0.0
    %57 = vmatpush1.msra.mxu0 0.0
    %58 = vmatprep.subr.mxu0 0.0
    %59 = vmatpush1.msra.mxu0 0.0
    %60 = vmatprep.subr.mxu0 0.0
    %61 = vmatpush1.msra.mxu0 0.0
    %62 = vmatprep.subr.mxu0 0.0
    %63 = vmatpush1.msra.mxu0 0.0
    %64 = vmatprep.subr.mxu0 0.0
    %65 = vmatpush1.msra.mxu0 0.0
    %66 = vmatprep.subr.mxu0 0.0
    %67 = vmatpush1.msra.mxu0 0.0
    %68 = vmatprep.subr.mxu0 0.0
    %69 = vmatpush1.msra.mxu0 0.0
    %70 = vmatprep.subr.mxu0 0.0
    %71 = vmatpush1.msra.mxu0 0.0
    %72 = vmatprep.subr.mxu0 0.0
    %73 = vmatpush1.msra.mxu0 0.0
    %74 = vmatprep.subr.mxu0 0.0
    %75 = vmatpush1.msra.mxu0 0.0
    %76 = vmatprep.subr.mxu0 0.0
    %77 = vmatpush1.msra.mxu0 0.0
    %78 = vmatprep.subr.mxu0 0.0
    %79 = vmatpush1.msra.mxu0 0.0
    %80 = vmatprep.subr.mxu0 0.0
    %81 = vmatpush1.msra.mxu0 0.0
    %82 = vmatprep.subr.mxu0 0.0
    %83 = vmatpush1.msra.mxu0 0.0
    %84 = vmatprep.subr.mxu0 0.0
    %85 = vmatpush1.msra.mxu0 0.0
    %86 = vmatprep.subr.mxu0 0.0
    %87 = vmatpush1.msra.mxu0 0.0
    %88 = vmatprep.subr.mxu0 0.0
    %89 = vmatpush1.msra.mxu0 0.0
    %90 = vmatprep.subr.mxu0 0.0
    %91 = vmatpush1.msra.mxu0 0.0
    %92 = vmatprep.subr.mxu0 0.0
    %93 = vmatpush1.msra.mxu0 0.0
    %94 = vmatprep.subr.mxu0 0.0
    %95 = vmatpush1.msra.mxu0 0.0
    %96 = vmatprep.subr.mxu0 0.0
    %97 = vmatpush1.msra.mxu0 0.0
    %98 = vmatprep.subr.mxu0 0.0
    %99 = vmatpush1.msra.mxu0 0.0
    %100 = vmatprep.subr.mxu0 0.0
    %101 = vmatpush1.msra.mxu0 0.0
    %102 = vmatprep.subr.mxu0 0.0
    %103 = vmatpush1.msra.mxu0 0.0
    %104 = vmatprep.subr.mxu0 0.0
    %105 = vmatpush1.msra.mxu0 0.0
    %106 = vmatprep.subr.mxu0 0.0
    %107 = vmatpush1.msra.mxu0 0.0
    %108 = vmatprep.subr.mxu0 0.0
    %109 = vmatpush1.msra.mxu0 0.0
    %110 = vmatprep.subr.mxu0 0.0
    %111 = vmatpush1.msra.mxu0 0.0
    %112 = vmatprep.subr.mxu0 0.0
    %113 = vmatpush1.msra.mxu0 0.0
    %114 = vmatprep.subr.mxu0 0.0
    %115 = vmatpush1.msra.mxu0 0.0
    %116 = vmatprep.mubr.f32.mxu0 0.0
    %117 = vmatmul.mubr.f32.gmra.mrb[0].mxu0 %v50
    %v118 = vpop.f32.mrb[0].mxu0
    %v119 = vadd.f32 %v46, %v118
    %v120 = vpop.f32.mrb[0].mxu0
    %121 = vdwg.mxu0
    %vm122 = vcmask 259072
    %123 = vst.msk [vmem:[#allocation7] sm:$0x3f] %vm122, %v119
    // Predicated region
    $region22: #{tpu_custom_call.1} parent=1 // pred_check
      _
    $region23: #{tpu_custom_call.1} parent=1 // pred_check_branch
      %125 = sbr.rel (0) target = $region25
    $region24: #{tpu_custom_call.1} parent=1 // pred_region
      %s127 = ssub.s32 128, 128
      %128 = vsyncadd [#allocation4], %s127
      %s130 = sshll.u32 [#allocation7], 4
      %s131 = int_to_ptr.vmem [resolvable:$true] %s130
      %133 = dma.vmem_to_hbm [thread:$0]  %s131, 128, %s3, [#allocation4]
    $region25: #{tpu_custom_call.1} parent=1 // pred_fallthru
      _
    // Predicated region
    $region26: #{tpu_custom_call.1} parent=1 // pred_check
      _
    $region27: #{tpu_custom_call.1} parent=1 // pred_check_branch
      %135 = sbr.rel (0) target = $region29
    $region28: #{tpu_custom_call.1} parent=1 // pred_region
      %136 = dma.done [#allocation4], 128
    $region29: #{tpu_custom_call.1} parent=1 // pred_fallthru
      _
    %137 = vsyncpa [#allocation3], 1
    %138 = vsyncpa [#allocation6], 1
    %139 = vsyncpa [#allocation4], 1

</llo_original>
